<compile_context>
chip_gen: v7x
topology: tpu7x:2x2x1
jax: 0.10.0
libtpu: 0.0.40
codegen_flags: <defaults>
</compile_context>

<pallas_src>
import functools

import jax
import jax.numpy as jnp
from jax.experimental import pallas as pl
from jax.experimental.pallas import tpu as pltpu


def _cosine_act_kernel(x_ref, o_ref):
    x = x_ref[...].astype(jnp.float32)
    o_ref[...] = (jnp.cos(x) - x).astype(o_ref.dtype)


def _sublane_multiple(dtype) -> int:
    itemsize = jnp.dtype(dtype).itemsize
    if itemsize >= 4:
        return 8
    if itemsize == 2:
        return 16
    return 32


@functools.partial(jax.jit, static_argnames=("target_block_bytes", "max_lane"))
def cosine_activation(x, *, target_block_bytes=2 << 20, max_lane=1024):
    """Applies cos(x) - x elementwise via a Pallas TPU kernel.

    Works for any shape/dtype; internally views the data as a wide,
    lane-dense (rows, lane) slab and tiles over rows with MiB-scale blocks.
    """
    orig_shape = x.shape
    dtype = x.dtype
    n = x.size
    if n == 0:
        return x

    itemsize = jnp.dtype(dtype).itemsize
    sub = _sublane_multiple(dtype)

    # Wide lane-dense last dim (multiple of 128); shrink only for tiny inputs
    # so padding stays negligible.
    lane = int(max_lane)
    while lane > 128 and n < lane * sub:
        lane //= 2
    lane = max(lane, 128)

    rows = pl.cdiv(n, lane)
    n_slab = rows * lane

    x_flat = jnp.ravel(x)
    padded = n_slab != n
    if padded:
        # At most lane-1 padded elements; skipped entirely in the aligned case.
        x_flat = jnp.pad(x_flat, (0, n_slab - n))
    x2d = x_flat.reshape(rows, lane)

    # Rows per block: aim for ~target_block_bytes, keep it a multiple of the
    # dtype's sublane packing, and keep >= 2 grid steps (v7x megacore) when
    # there is enough data.
    tile_rows = max(sub, ((target_block_bytes // (lane * itemsize)) // sub) * sub)
    if rows > 2 * sub:
        half = ((rows + 1) // 2 + sub - 1) // sub * sub  # ceil(rows/2) -> mult of sub
        tile_rows = min(tile_rows, half)
    if tile_rows >= rows:
        tile_rows = rows  # single full-extent block (allowed for any extent)

    grid = (pl.cdiv(rows, tile_rows),)

    block_bytes = tile_rows * lane * itemsize
    # Double-buffered input + output (~4x block) plus headroom; capped for
    # v7x's 64 MiB physical VMEM.
    vmem_limit = min(max(8 * block_bytes, 16 << 20), 64 << 20)

    out2d = pl.pallas_call(
        _cosine_act_kernel,
        out_shape=jax.ShapeDtypeStruct((rows, lane), dtype),
        grid=grid,
        in_specs=[pl.BlockSpec((tile_rows, lane), lambda i: (i, 0))],
        out_specs=pl.BlockSpec((tile_rows, lane), lambda i: (i, 0)),
        compiler_params=pltpu.CompilerParams(
            dimension_semantics=("parallel",),
            vmem_limit_bytes=vmem_limit,
        ),
    )(x2d)

    if padded:
        return out2d.reshape(-1)[:n].reshape(orig_shape)
    return out2d.reshape(orig_shape)


if __name__ == "__main__":
    key = jax.random.PRNGKey(0)

    # Small NCHW-style input consistent with a conv-net activation (aligned path).
    x = jax.random.normal(key, (2, 4, 16, 16), dtype=jnp.float32)
    out = jax.block_until_ready(cosine_activation(x))
    ref = jnp.cos(x) - x
    assert out.shape == x.shape and out.dtype == x.dtype
    assert jnp.allclose(out, ref, atol=1e-6, rtol=1e-6)

    # Odd-sized input to exercise the (tiny) padding / ragged path.
    x2 = jax.random.normal(jax.random.PRNGKey(1), (3, 5, 7), dtype=jnp.float32)
    out2 = jax.block_until_ready(cosine_activation(x2))
    ref2 = jnp.cos(x2) - x2
    assert out2.shape == x2.shape and out2.dtype == x2.dtype
    assert jnp.allclose(out2, ref2, atol=1e-6, rtol=1e-6)

    print("KERNEL_OK")
</pallas_src>

<mosaic_0001>
module attributes {stable_mosaic.version = 11 : i64} {
  func.func @_cosine_act_kernel(%arg0: i32, %arg1: memref<8x256xf32, #tpu.memory_space<vmem>>, %arg2: memref<8x256xf32, #tpu.memory_space<vmem>>) attributes {dimension_semantics = [#tpu.dimension_semantics<parallel>], iteration_bounds = array<i64: 1>, scalar_prefetch = 0 : i64, scratch_operands = 0 : i64, tpu.core_type = #tpu.core_type<tc>, window_params = [{transform_indices = @transform_0, window_bounds = array<i64: 8, 256>}, {transform_indices = @transform_1, window_bounds = array<i64: 8, 256>}]} {
    %c0 = arith.constant 0 : index
    %c0_0 = arith.constant 0 : index
    %0 = vector.load %arg1[%c0, %c0_0] : memref<8x256xf32, #tpu.memory_space<vmem>>, vector<8x256xf32>
    %1 = math.cos %0 : vector<8x256xf32>
    %2 = arith.subf %1, %0 : vector<8x256xf32>
    %c0_1 = arith.constant 0 : index
    %c0_2 = arith.constant 0 : index
    %3 = vector.load %arg2[%c0_1, %c0_2] : memref<8x256xf32, #tpu.memory_space<vmem>>, vector<8x256xf32>
    tpu.vector_store %arg2[%c0_1, %c0_2], %2 {strides = array<i32>} : memref<8x256xf32, #tpu.memory_space<vmem>>, vector<8x256xf32>,
    return
  }
  func.func @transform_0(%arg0: i32) -> (i32, i32) {
    %c0_i32 = arith.constant 0 : i32
    %c0_i32_0 = arith.constant 0 : i32
    return %arg0, %c0_i32 : i32, i32
  }
  func.func @transform_1(%arg0: i32) -> (i32, i32) {
    %c0_i32 = arith.constant 0 : i32
    %c0_i32_0 = arith.constant 0 : i32
    return %arg0, %c0_i32 : i32, i32
  }
}

</mosaic_0001>

<llo_original>
// kernel: cosine_activation.1
$region0: #{cosine_activation.1}
  #allocation0 [shape = 'u32[]', space=smem, size = 0x4, offset = 0x4, fixed_abs, tag = 'smem constant byte address 0x4 - core index']
  #allocation1 [shape = 'u32[144,128]{1,0:T(1,128)}', space=vmem, size = 0x12000, scoped, tag = 'internal scratch']
  %s0 = inlined_call_operand.vmem [shape: f32[8,256], index: 0, kind: input, shape index: {}]
  %s1 = inlined_call_operand.vmem [shape: f32[8,256], index: 1, kind: output, shape index: {}]
  %s2 = sld [smem:[#allocation0]]
  $region14: #{cosine_activation.1} parent=0
    _
  %s4 = ssub.s32 1, %s2
  %s5 = scalar_select 0, %s4, %s2
  // Predicated region
  $region2: #{cosine_activation.1} parent=0 // pred_check
    _
  $region3: #{cosine_activation.1} parent=0 // pred_check_branch
    %7 = sbr.rel (0) target = $region5
  $region4: #{cosine_activation.1} parent=0 // pred_region
    _
  $region5: #{cosine_activation.1} parent=0 // pred_fallthru
    _
  %v8 = vld [vmem:[%s0] sm:$0xff]
  %v9 = vld [vmem:[%s0 + $0x8] sm:$0xff]
  %v10 = vand.u32 2147483647, %v8
  %vm11 = vcmp.le.f32.partialorder %v10, 0.7853982
  %vm12 = vcmp.lt.s32.totalorder %v8, 0
  %v13 = vand.u32 %v8, 2139095040
  %v14 = vshrl.u32 %v13, 23
  %v15 = vsub.s32 %v14, 127
  %v16 = vand.u32 2147483647, %v8
  %v17 = vand.u32 %v16, 8388607
  %v18 = vor.u32 %v17, 8388608
  %v19 = vsub.s32 0, %v18
  %v20 = vadd.s32 %v15, 1
  %vm21 = vcmp.gt.s32.totalorder %v20, 0
  %v22 = vsel %vm21, %v20, 0
  %v23 = vshrl.u32 %v22, 5
  %v24 = vand.u32 %v22, 31
  %v25 = vsub.s32 32, %v24
  %v26 = vshrl.u32 683565275, %v25
  %v27 = vshll.u32 683565275, %v24
  %v28 = vshrl.u32 2475754826, %v25
  %v29 = vor.u32 %v27, %v28
  %v30 = vshll.u32 2475754826, %v24
  %v31 = vshrl.u32 2131351028, %v25
  %v32 = vor.u32 %v30, %v31
  %v33 = vshll.u32 2131351028, %v24
  %v34 = vshrl.u32 2102212464, %v25
  %v35 = vor.u32 %v33, %v34
  %v36 = vshll.u32 2102212464, %v24
  %v37 = vshrl.u32 920167782, %v25
  %v38 = vor.u32 %v36, %v37
  %v39 = vshll.u32 920167782, %v24
  %v40 = vshrl.u32 1326507024, %v25
  %v41 = vor.u32 %v39, %v40
  %vm42 = vcmp.lt.s32.totalorder %v23, 1
  %vm43 = vcmp.lt.s32.totalorder %v23, 2
  %vm44 = vcmp.lt.s32.totalorder %v23, 3
  %vm45 = vcmp.lt.s32.totalorder %v23, 4
  %v46 = vsel %vm42, %v26, %v29
  %v47 = vsel %vm45, %v35, 2102212464
  %v48 = vsel %vm44, %v32, %v47
  %v49 = vsel %vm43, %v46, %v48
  %v50 = vsel %vm42, %v29, %v32
  %v51 = vsel %vm45, %v38, 920167782
  %v52 = vsel %vm44, %v35, %v51
  %v53 = vsel %vm43, %v50, %v52
  %v54 = vsel %vm42, %v32, %v35
  %v55 = vsel %vm45, %v41, 1326507024
  %v56 = vsel %vm44, %v38, %v55
  %v57 = vsel %vm43, %v54, %v56
  %v58 = vshll.u32 %v18, 8
  %v59 = vmul.u32.u64.compose %v58, %v57
  %v60 = vextract.low.u32 %v59
  %v61 = vextract.high.u32 %v59
  %v62 = vmul.u32.u64.compose %v58, %v53
  %v63 = vextract.low.u32 %v62
  %v64 = vextract.high.u32 %v62
  %v65 = vmul.u32 %v58, %v49
  %v66 = vadd.s32 %v61, %v63
  %vm67 = vc.u32 %v61, %v63
  %v68 = vadd.s32 %v64, 1
  %v69 = vsel %vm67, %v68, %v64
  %v70 = vadd.s32 %v65, %v69
  %v71 = vadd.s32 %v70, 536870912
  %v72 = vshrl.u32 %v71, 30
  %v73 = vshll.u32 %v72, 30
  %v74 = vsub.s32 %v70, %v73
  %vm75 = vcmp.lt.s32.totalorder %v74, 0
  %v76 = vsub.s32 0, %v74
  %v77 = vsel %vm75, %v76, %v74
  %v78 = vclz %v77
  %v79 = vsub.s32 %v78, 2
  %vm80 = vcmp.gt.s32.totalorder 0, %v79
  %v81 = vsel %vm80, 0, %v79
  %v82 = vsub.s32 32, %v81
  %v83 = vshll.u32 %v74, %v81
  %v84 = vshrl.u32 %v66, %v82
  %v85 = vor.u32 %v83, %v84
  %v86 = vsub.s32 4294967266, %v81
  %v87 = vadd.s32 %v86, 127
  %v88 = vshll.u32 %v87, 23
  %v89 = vor.u32 4788187, %v88
  %v90 = vand.u32 2147483647, %v89
  %v92 = vcvt.s32.f32 %v85
  %v93 = vmul.f32 %v92, %v90
  %v94 = vxor.u32 %v93, 2147483648
  %v95 = vsel %vm12, %v94, %v93
  %v96 = vsub.s32 4, %v72
  %v97 = vsel %vm12, %v96, %v72
  %v98 = vsel %vm11, %v8, %v95
  %v99 = vsel %vm11, 0, %v97
  %v100 = vcosq.f32.pop %v98
  %v101 = vsinq.f32.pop %v98
  %vm102 = vweird.f32 %v8
  %v103 = vand.u32 %v99, 3
  %vm104 = vcmp.lt.s32.totalorder %v103, 2
  %vm105 = vcmp.eq.s32.totalorder %v103, 0
  %v106 = vxor.u32 %v101, 2147483648
  %v107 = vsel %vm105, %v100, %v106
  %vm108 = vcmp.eq.s32.totalorder %v103, 2
  %v109 = vxor.u32 %v100, 2147483648
  %v110 = vsel %vm108, %v109, %v101
  %v111 = vsel %vm104, %v107, %v110
  %v112 = vsel %vm102, nan, %v111
  %v113 = vand.u32 2147483647, %v9
  %vm114 = vcmp.le.f32.partialorder %v113, 0.7853982
  %vm115 = vcmp.lt.s32.totalorder %v9, 0
  %v116 = vand.u32 %v9, 2139095040
  %v117 = vshrl.u32 %v116, 23
  %v118 = vsub.s32 %v117, 127
  %v119 = vand.u32 2147483647, %v9
  %v120 = vand.u32 %v119, 8388607
  %v121 = vor.u32 %v120, 8388608
  %v122 = vsub.s32 0, %v121
  %v123 = vadd.s32 %v118, 1
  %vm124 = vcmp.gt.s32.totalorder %v123, 0
  %v125 = vsel %vm124, %v123, 0
  %v126 = vshrl.u32 %v125, 5
  %v127 = vand.u32 %v125, 31
  %v128 = vsub.s32 32, %v127
  %v129 = vshrl.u32 683565275, %v128
  %v130 = vshll.u32 683565275, %v127
  %v131 = vshrl.u32 2475754826, %v128
  %v132 = vor.u32 %v130, %v131
  %v133 = vshll.u32 2475754826, %v127
  %v134 = vshrl.u32 2131351028, %v128
  %v135 = vor.u32 %v133, %v134
  %v136 = vshll.u32 2131351028, %v127
  %v137 = vshrl.u32 2102212464, %v128
  %v138 = vor.u32 %v136, %v137
  %v139 = vshll.u32 2102212464, %v127
  %v140 = vshrl.u32 920167782, %v128
  %v141 = vor.u32 %v139, %v140
  %v142 = vshll.u32 920167782, %v127
  %v143 = vshrl.u32 1326507024, %v128
  %v144 = vor.u32 %v142, %v143
  %vm145 = vcmp.lt.s32.totalorder %v126, 1
  %vm146 = vcmp.lt.s32.totalorder %v126, 2
  %vm147 = vcmp.lt.s32.totalorder %v126, 3
  %vm148 = vcmp.lt.s32.totalorder %v126, 4
  %v149 = vsel %vm145, %v129, %v132
  %v150 = vsel %vm148, %v138, 2102212464
  %v151 = vsel %vm147, %v135, %v150
  %v152 = vsel %vm146, %v149, %v151
  %v153 = vsel %vm145, %v132, %v135
  %v154 = vsel %vm148, %v141, 920167782
  %v155 = vsel %vm147, %v138, %v154
  %v156 = vsel %vm146, %v153, %v155
  %v157 = vsel %vm145, %v135, %v138
  %v158 = vsel %vm148, %v144, 1326507024
  %v159 = vsel %vm147, %v141, %v158
  %v160 = vsel %vm146, %v157, %v159
  %v161 = vshll.u32 %v121, 8
  %v162 = vmul.u32.u64.compose %v161, %v160
  %v163 = vextract.low.u32 %v162
  %v164 = vextract.high.u32 %v162
  %v165 = vmul.u32.u64.compose %v161, %v156
  %v166 = vextract.low.u32 %v165
  %v167 = vextract.high.u32 %v165
  %v168 = vmul.u32 %v161, %v152
  %v169 = vadd.s32 %v164, %v166
  %vm170 = vc.u32 %v164, %v166
  %v171 = vadd.s32 %v167, 1
  %v172 = vsel %vm170, %v171, %v167
  %v173 = vadd.s32 %v168, %v172
  %v174 = vadd.s32 %v173, 536870912
  %v175 = vshrl.u32 %v174, 30
  %v176 = vshll.u32 %v175, 30
  %v177 = vsub.s32 %v173, %v176
  %vm178 = vcmp.lt.s32.totalorder %v177, 0
  %v179 = vsub.s32 0, %v177
  %v180 = vsel %vm178, %v179, %v177
  %v181 = vclz %v180
  %v182 = vsub.s32 %v181, 2
  %vm183 = vcmp.gt.s32.totalorder 0, %v182
  %v184 = vsel %vm183, 0, %v182
  %v185 = vsub.s32 32, %v184
  %v186 = vshll.u32 %v177, %v184
  %v187 = vshrl.u32 %v169, %v185
  %v188 = vor.u32 %v186, %v187
  %v189 = vsub.s32 4294967266, %v184
  %v190 = vadd.s32 %v189, 127
  %v191 = vshll.u32 %v190, 23
  %v192 = vor.u32 4788187, %v191
  %v193 = vand.u32 2147483647, %v192
  %v195 = vcvt.s32.f32 %v188
  %v196 = vmul.f32 %v195, %v193
  %v197 = vxor.u32 %v196, 2147483648
  %v198 = vsel %vm115, %v197, %v196
  %v199 = vsub.s32 4, %v175
  %v200 = vsel %vm115, %v199, %v175
  %v201 = vsel %vm114, %v9, %v198
  %v202 = vsel %vm114, 0, %v200
  %v203 = vcosq.f32.pop %v201
  %v204 = vsinq.f32.pop %v201
  %vm205 = vweird.f32 %v9
  %v206 = vand.u32 %v202, 3
  %vm207 = vcmp.lt.s32.totalorder %v206, 2
  %vm208 = vcmp.eq.s32.totalorder %v206, 0
  %v209 = vxor.u32 %v204, 2147483648
  %v210 = vsel %vm208, %v203, %v209
  %vm211 = vcmp.eq.s32.totalorder %v206, 2
  %v212 = vxor.u32 %v203, 2147483648
  %v213 = vsel %vm211, %v212, %v204
  %v214 = vsel %vm207, %v210, %v213
  %v215 = vsel %vm205, nan, %v214
  %v216 = vsub.f32 %v112, %v8
  %v217 = vsub.f32 %v215, %v9
  %218 = vst [vmem:[%s1] sm:$0xff] %v216
  %219 = vst [vmem:[%s1 + $0x8] sm:$0xff] %v217
  // Predicated region
  $region6: #{cosine_activation.1} parent=0 // pred_check
    _
  $region7: #{cosine_activation.1} parent=0 // pred_check_branch
    %221 = sbr.rel (0) target = $region9
  $region8: #{cosine_activation.1} parent=0 // pred_region
    _
  $region9: #{cosine_activation.1} parent=0 // pred_fallthru
    _
  // Predicated region
  $region10: #{cosine_activation.1} parent=0 // pred_check
    _
  $region11: #{cosine_activation.1} parent=0 // pred_check_branch
    %223 = sbr.rel (0) target = $region13
  $region12: #{cosine_activation.1} parent=0 // pred_region
    _
  $region13: #{cosine_activation.1} parent=0 // pred_fallthru
    _

</llo_original>
